<compile_context>
chip_gen: v6e
topology: v6e:2x2x1
jax: 0.10.0
libtpu: 0.0.40
codegen_flags: <defaults>
</compile_context>

<pallas_src>
import functools

import jax
import jax.numpy as jnp
import numpy as np
from jax import lax
from jax.experimental import pallas as pl
from jax.experimental.pallas import tpu as pltpu


def _round_up(x, m):
    return (x + m - 1) // m * m


# ---------------------------------------------------------------------------
# Kernel A: S = softmax(S_param/temp) per N-tile,
#           gene_pool[K, D] accumulated over N-tiles (contraction over dim 0,
#           no explicit transpose).
# ---------------------------------------------------------------------------
def _score_and_genepool_kernel(s_param_ref, gene_embed_ref, s_ref, gene_pool_ref,
                               *, inv_temp):
    i = pl.program_id(0)

    logits = s_param_ref[...] * inv_temp
    m = jnp.max(logits, axis=1, keepdims=True)
    e = jnp.exp(logits - m)
    s = e / jnp.sum(e, axis=1, keepdims=True)      # softmax(S_param / temp, dim=1)
    s_ref[...] = s

    @pl.when(i == 0)
    def _():
        gene_pool_ref[...] = jnp.zeros_like(gene_pool_ref)

    # gene_pool += S^T @ gene_embed, expressed as a contraction over dim 0
    # (avoids materializing the XLU transpose of the S tile).
    gene_pool_ref[...] += lax.dot_general(
        s, gene_embed_ref[...],
        dimension_numbers=(((0,), (0,)), ((), ())),
        preferred_element_type=jnp.float32)


# ---------------------------------------------------------------------------
# Kernel B: expr_pool[B, K] = expr @ S accumulated over N-tiles; log-norm
#           applied only in the last-N epilogue.  Grid = (batch, N) with the
#           batch axis parallel (megacore) and N arbitrary (reduction).
# ---------------------------------------------------------------------------
def _expr_pool_kernel(expr_ref, s_ref, expr_pool_ref, *, log_norm):
    j = pl.program_id(1)

    @pl.when(j == 0)
    def _():
        expr_pool_ref[...] = jnp.zeros_like(expr_pool_ref)

    expr_pool_ref[...] += jnp.dot(expr_ref[...], s_ref[...],
                                  preferred_element_type=jnp.float32)

    if log_norm:
        @pl.when(j == pl.num_programs(1) - 1)
        def _():
            ep = expr_pool_ref[...]
            ep = ep / (jnp.sum(ep, axis=1, keepdims=True) + 1e-4) * 1e5
            expr_pool_ref[...] = jnp.log1p(ep)


# ---------------------------------------------------------------------------
# Python wrapper (forward pass of GenePoolVanilla)
# ---------------------------------------------------------------------------
def gene_pool_vanilla_forward(s_param, expr, gene_embed, *,
                              temp=0.5, log_norm=True, tn=1024, tb=256):
    N, K = s_param.shape
    B, N2 = expr.shape
    N3, D = gene_embed.shape
    assert N == N2 == N3

    # Tile sizes: tn is shared by both kernels and sits on expr's lane axis,
    # so it must be a multiple of 128; tb is a sublane axis -> multiple of 8.
    tn = min(tn, _round_up(N, 128))
    tb = min(tb, _round_up(B, 8))
    N_pad = _round_up(N, tn)
    B_pad = _round_up(B, tb)
    K_pad = _round_up(K, 128)   # lane-dense outputs (unmasked vst)
    D_pad = _round_up(D, 128)

    # Padding: padded K logits get -1e30 so their softmax weight is exactly 0;
    # padded N rows of gene_embed and padded N cols of expr are 0, so padded
    # genes contribute nothing to either pooled output.
    s_param_p = jnp.pad(s_param.astype(jnp.float32),
                        ((0, N_pad - N), (0, K_pad - K)),
                        constant_values=((0.0, 0.0), (0.0, -1e30)))
    expr_p = jnp.pad(expr.astype(jnp.float32),
                     ((0, B_pad - B), (0, N_pad - N)))
    gene_embed_p = jnp.pad(gene_embed.astype(jnp.float32),
                           ((0, N_pad - N), (0, D_pad - D)))

    inv_temp = float(1.0 / temp)

    # --- Kernel A: S + gene_pool, tiled over N -------------------------------
    cost_a = pl.CostEstimate(
        flops=2 * N_pad * K_pad * D_pad + 5 * N_pad * K_pad,
        transcendentals=N_pad * K_pad,
        bytes_accessed=4 * (2 * N_pad * K_pad + N_pad * D_pad + K_pad * D_pad))

    s_p, gene_pool_p = pl.pallas_call(
        functools.partial(_score_and_genepool_kernel, inv_temp=inv_temp),
        out_shape=(
            jax.ShapeDtypeStruct((N_pad, K_pad), jnp.float32),
            jax.ShapeDtypeStruct((K_pad, D_pad), jnp.float32),
        ),
        grid_spec=pltpu.PrefetchScalarGridSpec(
            num_scalar_prefetch=0,
            grid=(N_pad // tn,),
            in_specs=[
                pl.BlockSpec((tn, K_pad), lambda i: (i, 0)),
                pl.BlockSpec((tn, D_pad), lambda i: (i, 0)),
            ],
            out_specs=[
                pl.BlockSpec((tn, K_pad), lambda i: (i, 0)),
                pl.BlockSpec((K_pad, D_pad), lambda i: (0, 0)),  # resident accumulator
            ],
        ),
        compiler_params=pltpu.CompilerParams(
            dimension_semantics=("arbitrary",)),
        cost_estimate=cost_a,
    )(s_param_p, gene_embed_p)

    # --- Kernel B: expr_pool = expr @ S (+ log-norm), tiled over (B, N) ------
    cost_b = pl.CostEstimate(
        flops=2 * B_pad * N_pad * K_pad + 4 * B_pad * K_pad,
        transcendentals=B_pad * K_pad,
        bytes_accessed=4 * (B_pad * N_pad + N_pad * K_pad + B_pad * K_pad))

    expr_pool_p = pl.pallas_call(
        functools.partial(_expr_pool_kernel, log_norm=log_norm),
        out_shape=jax.ShapeDtypeStruct((B_pad, K_pad), jnp.float32),
        grid_spec=pltpu.PrefetchScalarGridSpec(
            num_scalar_prefetch=0,
            grid=(B_pad // tb, N_pad // tn),
            in_specs=[
                pl.BlockSpec((tb, tn), lambda i, j: (i, j)),
                pl.BlockSpec((tn, K_pad), lambda i, j: (j, 0)),
            ],
            out_specs=pl.BlockSpec((tb, K_pad), lambda i, j: (i, 0)),
        ),
        compiler_params=pltpu.CompilerParams(
            dimension_semantics=("parallel", "arbitrary")),
        cost_estimate=cost_b,
    )(expr_p, s_p)

    # Strip padding.
    s = s_p[:N, :K]
    gene_pool = gene_pool_p[:K, :D]
    expr_pool = expr_pool_p[:B, :K]
    return s, gene_pool, expr_pool


# ---------------------------------------------------------------------------
# Pure-JAX reference (mirrors the PyTorch forward exactly)
# ---------------------------------------------------------------------------
def reference_forward(s_param, expr, gene_embed, *, temp=0.5, log_norm=True):
    hi = jax.lax.Precision.HIGHEST
    s = jax.nn.softmax(s_param / temp, axis=1)
    expr_pool = jnp.dot(expr, s, precision=hi)
    gene_pool = jnp.dot(s.T, gene_embed, precision=hi)
    if log_norm:
        expr_pool = expr_pool / (jnp.sum(expr_pool, axis=1, keepdims=True) + 1e-4) * 1e5
        expr_pool = jnp.log1p(expr_pool)
    return s, gene_pool, expr_pool


if __name__ == "__main__":
    # Small but non-trivial shapes: exercise multi-step N accumulation,
    # K/D lane padding, and multiple batch tiles.
    N, K, B, D = 768, 96, 384, 200
    temp = 0.5

    key = jax.random.PRNGKey(0)
    k1, k2, k3 = jax.random.split(key, 3)
    # nn.Parameter(torch.rand(N, K)) -> uniform [0, 1)
    s_param = jax.random.uniform(k1, (N, K), dtype=jnp.float32)
    # expression counts: non-negative
    expr = jax.random.uniform(k2, (B, N), dtype=jnp.float32) * 10.0
    gene_embed = jax.random.normal(k3, (N, D), dtype=jnp.float32)

    # Small tiles here so the demo actually runs >1 grid step per axis;
    # production defaults are tn=1024, tb=256.
    s, gene_pool, expr_pool = gene_pool_vanilla_forward(
        s_param, expr, gene_embed, temp=temp, log_norm=True, tn=256, tb=128)
    jax.block_until_ready((s, gene_pool, expr_pool))

    s_ref, gene_pool_ref, expr_pool_ref = reference_forward(
        s_param, expr, gene_embed, temp=temp, log_norm=True)

    np.testing.assert_allclose(np.asarray(s), np.asarray(s_ref),
                               rtol=1e-4, atol=1e-5)
    np.testing.assert_allclose(np.asarray(gene_pool), np.asarray(gene_pool_ref),
                               rtol=1e-4, atol=1e-5)
    np.testing.assert_allclose(np.asarray(expr_pool), np.asarray(expr_pool_ref),
                               rtol=1e-4, atol=1e-5)

    print("KERNEL_OK")
</pallas_src>

<mosaic_0001>
module attributes {stable_mosaic.version = 11 : i64} {
  func.func @_score_and_genepool_kernel(%arg0: i32, %arg1: memref<256x128xf32, #tpu.memory_space<vmem>>, %arg2: memref<256x256xf32, #tpu.memory_space<vmem>>, %arg3: memref<256x128xf32, #tpu.memory_space<vmem>>, %arg4: memref<128x256xf32, #tpu.memory_space<vmem>>) attributes {dimension_semantics = [#tpu.dimension_semantics<arbitrary>], iteration_bounds = array<i64: 3>, scalar_prefetch = 0 : i64, scratch_operands = 0 : i64, tpu.core_type = #tpu.core_type<tc>, window_params = [{transform_indices = @transform_0, window_bounds = array<i64: 256, 128>}, {transform_indices = @transform_1, window_bounds = array<i64: 256, 256>}, {transform_indices = @transform_2, window_bounds = array<i64: 256, 128>}, {pipeline_mode = #tpu.pipeline_mode<synchronous>, transform_indices = @transform_3, window_bounds = array<i64: 128, 256>}]} {
    %c0 = arith.constant 0 : index
    %c0_0 = arith.constant 0 : index
    %0 = vector.load %arg1[%c0, %c0_0] : memref<256x128xf32, #tpu.memory_space<vmem>>, vector<256x128xf32>
    %cst = arith.constant 2.000000e+00 : f32
    %1 = vector.broadcast %cst : f32 to vector<256x128xf32>
    %2 = arith.mulf %0, %1 : vector<256x128xf32>
    %cst_1 = arith.constant dense<0xFF800000> : vector<256xf32>
    %3 = vector.multi_reduction <maximumf>, %2, %cst_1 [1] : vector<256x128xf32> to vector<256xf32>
    %4 = vector.shape_cast %3 : vector<256xf32> to vector<256x1xf32>
    %5 = vector.broadcast %4 : vector<256x1xf32> to vector<256x128xf32>
    %6 = arith.subf %2, %5 : vector<256x128xf32>
    %7 = math.exp %6 : vector<256x128xf32>
    %cst_2 = arith.constant dense<0.000000e+00> : vector<256xf32>
    %8 = vector.multi_reduction <add>, %7, %cst_2 [1] : vector<256x128xf32> to vector<256xf32>
    %9 = vector.shape_cast %8 : vector<256xf32> to vector<256x1xf32>
    %10 = vector.broadcast %9 : vector<256x1xf32> to vector<256x128xf32>
    %11 = arith.divf %7, %10 : vector<256x128xf32>
    %c0_3 = arith.constant 0 : index
    %c0_4 = arith.constant 0 : index
    %12 = vector.load %arg3[%c0_3, %c0_4] : memref<256x128xf32, #tpu.memory_space<vmem>>, vector<256x128xf32>
    tpu.vector_store %arg3[%c0_3, %c0_4], %11 {strides = array<i32>} : memref<256x128xf32, #tpu.memory_space<vmem>>, vector<256x128xf32>,
    %c0_i32 = arith.constant 0 : i32
    %13 = arith.cmpi eq, %arg0, %c0_i32 : i32
    %14 = arith.extui %13 : i1 to i32
    %c0_i32_5 = arith.constant 0 : i32
    %15 = arith.cmpi ne, %14, %c0_i32_5 : i32
    scf.if %15 {
      %cst_13 = arith.constant 0.000000e+00 : f32
      %21 = vector.broadcast %cst_13 : f32 to vector<128x256xf32>
      %c0_14 = arith.constant 0 : index
      %c0_15 = arith.constant 0 : index
      %22 = vector.load %arg4[%c0_14, %c0_15] : memref<128x256xf32, #tpu.memory_space<vmem>>, vector<128x256xf32>
      tpu.vector_store %arg4[%c0_14, %c0_15], %21 {strides = array<i32>} : memref<128x256xf32, #tpu.memory_space<vmem>>, vector<128x256xf32>,
    } else {
    }
    %c0_6 = arith.constant 0 : index
    %c0_7 = arith.constant 0 : index
    %16 = vector.load %arg4[%c0_6, %c0_7] : memref<128x256xf32, #tpu.memory_space<vmem>>, vector<128x256xf32>
    %c0_8 = arith.constant 0 : index
    %c0_9 = arith.constant 0 : index
    %17 = vector.load %arg2[%c0_8, %c0_9] : memref<256x256xf32, #tpu.memory_space<vmem>>, vector<256x256xf32>
    %cst_10 = arith.constant dense<0.000000e+00> : vector<128x256xf32>
    %18 = tpu.matmul %11, %17, %cst_10 {dimension_numbers = #tpu.dot_dimension_numbers<[0], [0], [1], [1], [0, 1, 1, 1], [], []>} : vector<256x128xf32>, vector<256x256xf32>, vector<128x256xf32> -> vector<128x256xf32>
    %19 = arith.addf %16, %18 : vector<128x256xf32>
    %c0_11 = arith.constant 0 : index
    %c0_12 = arith.constant 0 : index
    %20 = vector.load %arg4[%c0_11, %c0_12] : memref<128x256xf32, #tpu.memory_space<vmem>>, vector<128x256xf32>
    tpu.vector_store %arg4[%c0_11, %c0_12], %19 {strides = array<i32>} : memref<128x256xf32, #tpu.memory_space<vmem>>, vector<128x256xf32>,
    return
  }
  func.func @transform_0(%arg0: i32) -> (i32, i32) {
    %c0_i32 = arith.constant 0 : i32
    %c0_i32_0 = arith.constant 0 : i32
    return %arg0, %c0_i32 : i32, i32
  }
  func.func @transform_1(%arg0: i32) -> (i32, i32) {
    %c0_i32 = arith.constant 0 : i32
    %c0_i32_0 = arith.constant 0 : i32
    return %arg0, %c0_i32 : i32, i32
  }
  func.func @transform_2(%arg0: i32) -> (i32, i32) {
    %c0_i32 = arith.constant 0 : i32
    %c0_i32_0 = arith.constant 0 : i32
    return %arg0, %c0_i32 : i32, i32
  }
  func.func @transform_3(%arg0: i32) -> (i32, i32) {
    %c0_i32 = arith.constant 0 : i32
    %c0_i32_0 = arith.constant 0 : i32
    %c0_i32_1 = arith.constant 0 : i32
    return %c0_i32, %c0_i32_0 : i32, i32
  }
}

</mosaic_0001>

<llo_original>
// kernel: tpu_custom_call.1
$region0: #{tpu_custom_call.1}
  #allocation0 [shape = 'u32[]', space=smem, size = 0x4, offset = 0x4, fixed_abs, tag = 'smem constant byte address 0x4 - core index']
  #allocation1 [shape = 'u32[144,128]{1,0:T(1,128)}', space=vmem, size = 0x12000, scoped, tag = 'internal scratch']
  %s0 = inlined_call_operand.hbm [shape: f32[768,128], index: 0, kind: input, shape index: {}]
  %s1 = inlined_call_operand.hbm [shape: f32[768,256], index: 1, kind: input, shape index: {}]
  %s2 = inlined_call_operand.hbm [shape: f32[768,128], index: 2, kind: output, shape index: {0}]
  %s3 = inlined_call_operand.hbm [shape: f32[128,256], index: 3, kind: output, shape index: {1}]
  %4 = xla_tuple %s2, %s3
  %s5 = sld [smem:[#allocation0]]
  $region61: #{tpu_custom_call.1} parent=0
    _
  %s7 = ssub.s32 1, %s5
  %s8 = scalar_select 0, %s7, %s5
  $region1: #{tpu_custom_call.1} parent=0
    #allocation2 [shape = 'u8[262144]{0}', space=vmem, size = 0x40000, scoped, tag = 'input window, operand 0']
    #allocation3 [shape = 's32[2]{0}', space=sflag, size = 0x8, scoped, tag = 'scoped memory for tpu_custom_call.1']
    #allocation4 [shape = 's32[2]{0}', space=sflag, size = 0x8, scoped, tag = 'scoped memory for tpu_custom_call.1']
    #allocation5 [shape = 'u8[524288]{0}', space=vmem, size = 0x80000, scoped, tag = 'input window, operand 1']
    #allocation6 [shape = 's32[2]{0}', space=sflag, size = 0x8, scoped, tag = 'scoped memory for tpu_custom_call.1']
    #allocation7 [shape = 'u8[262144]{0}', space=vmem, size = 0x40000, scoped, tag = 'output window, operand 0']
    #allocation8 [shape = 'u8[131072]{0}', space=vmem, size = 0x20000, scoped, tag = 'output window, operand 1, single buffered']
    #allocation9 [shape = 's32[1]{0}', space=sflag, size = 0x4, scoped, tag = 'scoped memory for tpu_custom_call.1']
    %9 = vsyncpa [#allocation3], 0
    %s10 = scalar_lea.sflag [#allocation3], 1
    %11 = vsyncpa %s10, 0
    %12 = vsyncpa [#allocation6], 0
    %s13 = scalar_lea.sflag [#allocation6], 1
    %14 = vsyncpa %s13, 0
    %15 = vsyncpa [#allocation4], 0
    %s16 = scalar_lea.sflag [#allocation4], 1
    %17 = vsyncpa %s16, 0
    %18 = vsyncpa [#allocation9], 0
    loop: start=0, step=1, limit=5
    $region2: #{tpu_custom_call.1} parent=1 // loop_pre_header
      _
    $region3: #{tpu_custom_call.1} parent=1 // loop_header
      %s20 = sphi 0, %s24
      %p21 = scmp.ge.s32.totalorder %s20, 5
      %s30 = sphi 0, %s32
      %s33 = sphi 0, %s30
      %s34 = sphi 0, %s33
      %s50 = sphi 0, %s34
      %s56 = sphi 0, %s58
      %s59 = sphi 0, %s56
      %s60 = sphi 0, %s59
      %s76 = sphi 0, %s60
      %s82 = sphi 0, %s84
      %s85 = sphi 0, %s82
      %s86 = sphi 0, %s85
      %s102 = sphi 0, %s86
      %s106 = sphi 0, %s106
      %s108 = sphi 0, %s106
      %s109 = sphi 0, %s108
      %s123 = sphi 0, %s109
    $region4: #{tpu_custom_call.1} parent=1 // loop_header_branch
      %23 = sbr.rel (%p21) target = $region8
    $region5: #{tpu_custom_call.1} parent=1 // loop_body
      %s25 = ssub.s32 %s20, 1
      %s26 = ssub.s32 %s20, 2
      %s27 = sadd.s32 %s20, 1
      %s28 = ssub.s32 %s20, %s27
      %p29 = scmp.eq.s32.totalorder %s28, 0
      %s31 = sadd.s32 %s30, 1
      %s32 = scalar_select %p29, %s30, %s31
      %p35 = pneg %p29
      %p36 = scmp.eq.s32.totalorder %s20, 2
      %p37 = por %p35, %p36
      %p38 = scmp.ne.s32.totalorder %s30, %s33
      %p39 = scmp.eq.s32.totalorder %s20, 0
      %p40 = por %p38, %p39
      %p41 = scmp.ne.s32.totalorder %s30, %s33
      %p42 = scmp.eq.s32.totalorder %s25, 2
      %p43 = por %p41, %p42
      %p44 = scmp.ne.s32.totalorder %s33, %s34
      %p45 = scmp.eq.s32.totalorder %s25, 0
      %p46 = por %p44, %p45
      %p47 = scmp.ne.s32.totalorder %s33, %s34
      %p48 = scmp.eq.s32.totalorder %s26, 2
      %p49 = por %p47, %p48
      %p51 = scmp.ne.s32.totalorder %s34, %s50
      %p52 = scmp.eq.s32.totalorder %s26, 0
      %p53 = por %p51, %p52
      %s54 = ssub.s32 %s20, %s27
      %p55 = scmp.eq.s32.totalorder %s54, 0
      %s57 = sadd.s32 %s56, 1
      %s58 = scalar_select %p55, %s56, %s57
      %p61 = pneg %p55
      %p62 = scmp.eq.s32.totalorder %s20, 2
      %p63 = por %p61, %p62
      %p64 = scmp.ne.s32.totalorder %s56, %s59
      %p65 = scmp.eq.s32.totalorder %s20, 0
      %p66 = por %p64, %p65
      %p67 = scmp.ne.s32.totalorder %s56, %s59
      %p68 = scmp.eq.s32.totalorder %s25, 2
      %p69 = por %p67, %p68
      %p70 = scmp.ne.s32.totalorder %s59, %s60
      %p71 = scmp.eq.s32.totalorder %s25, 0
      %p72 = por %p70, %p71
      %p73 = scmp.ne.s32.totalorder %s59, %s60
      %p74 = scmp.eq.s32.totalorder %s26, 2
      %p75 = por %p73, %p74
      %p77 = scmp.ne.s32.totalorder %s60, %s76
      %p78 = scmp.eq.s32.totalorder %s26, 0
      %p79 = por %p77, %p78
      %s80 = ssub.s32 %s20, %s27
      %p81 = scmp.eq.s32.totalorder %s80, 0
      %s83 = sadd.s32 %s82, 1
      %s84 = scalar_select %p81, %s82, %s83
      %p87 = pneg %p81
      %p88 = scmp.eq.s32.totalorder %s20, 2
      %p89 = por %p87, %p88
      %p90 = scmp.ne.s32.totalorder %s82, %s85
      %p91 = scmp.eq.s32.totalorder %s20, 0
      %p92 = por %p90, %p91
      %p93 = scmp.ne.s32.totalorder %s82, %s85
      %p94 = scmp.eq.s32.totalorder %s25, 2
      %p95 = por %p93, %p94
      %p96 = scmp.ne.s32.totalorder %s85, %s86
      %p97 = scmp.eq.s32.totalorder %s25, 0
      %p98 = por %p96, %p97
      %p99 = scmp.ne.s32.totalorder %s85, %s86
      %p100 = scmp.eq.s32.totalorder %s26, 2
      %p101 = por %p99, %p100
      %p103 = scmp.ne.s32.totalorder %s86, %s102
      %p104 = scmp.eq.s32.totalorder %s26, 0
      %p105 = por %p103, %p104
      %s107 = sadd.s32 %s106, 1
      %p110 = scmp.eq.s32.totalorder %s20, 2
      %p111 = scmp.ne.s32.totalorder %s106, %s108
      %p112 = scmp.eq.s32.totalorder %s20, 0
      %p113 = por %p111, %p112
      %p114 = scmp.ne.s32.totalorder %s106, %s108
      %p115 = scmp.eq.s32.totalorder %s25, 2
      %p116 = por %p114, %p115
      %p117 = scmp.ne.s32.totalorder %s108, %s109
      %p118 = scmp.eq.s32.totalorder %s25, 0
      %p119 = por %p117, %p118
      %p120 = scmp.ne.s32.totalorder %s108, %s109
      %p121 = scmp.eq.s32.totalorder %s26, 2
      %p122 = por %p120, %p121
      %p124 = scmp.ne.s32.totalorder %s109, %s123
      %p125 = scmp.eq.s32.totalorder %s26, 0
      %p126 = por %p124, %p125
      %p127 = scmp.le.s32.totalorder 1, %s20
      %p128 = scmp.lt.s32.totalorder %s20, 4
      %p129 = pnand %p127, %p128
      %p130 = pneg %p129
      // Predicated region
      $region9: #{tpu_custom_call.1} parent=5 // pred_check
        _
      $region10: #{tpu_custom_call.1} parent=5 // pred_check_branch
        %132 = sbr.rel (%p129) target = $region12
      $region11: #{tpu_custom_call.1} parent=5 // pred_region
        %s133 = ssub.s32 %s20, 1
      $region12: #{tpu_custom_call.1} parent=5 // pred_fallthru
        _
      %p134 = scmp.lt.s32.totalorder %s20, 3
      // Predicated region
      $region13: #{tpu_custom_call.1} parent=5 // pred_check
        %p135 = pneg %p134
      $region14: #{tpu_custom_call.1} parent=5 // pred_check_branch
        %137 = sbr.rel (%p135) target = $region16
      $region15: #{tpu_custom_call.1} parent=5 // pred_region
        // Predicated region
        $region17: #{tpu_custom_call.1} parent=15 // pred_check
          %p138 = pneg %p40
        $region18: #{tpu_custom_call.1} parent=15 // pred_check_branch
          %140 = sbr.rel (%p138) target = $region20
        $region19: #{tpu_custom_call.1} parent=15 // pred_region
          %s141 = sand.u32 %s30, 1
          %s142 = scalar_lea.sflag [#allocation3], %s141
          %s143 = sand.u32 %s30, 1
          %s144 = smul.addr %s143, 256
          %s145 = scalar_lea.vmem [#allocation2], %s144
          %s146 = smul.u32 32, %s20
          %s148 = ssub.s32 4096, 4096
          %149 = vsyncadd %s142, %s148
          %s150 = smul.addr %s146, 128
          %s151 = scalar_lea.hbm %s0, %s150
          %s152 = sshll.u32 %s145, 4
          %s153 = int_to_ptr.vmem [resolvable:$true] %s152
          %158 = dma.hbm_to_vmem [thread:$0]  %s151, 4096, %s153, %s142, 128, 128, 8
        $region20: #{tpu_custom_call.1} parent=15 // pred_fallthru
          _
        // Predicated region
        $region21: #{tpu_custom_call.1} parent=15 // pred_check
          %p159 = pneg %p66
        $region22: #{tpu_custom_call.1} parent=15 // pred_check_branch
          %161 = sbr.rel (%p159) target = $region24
        $region23: #{tpu_custom_call.1} parent=15 // pred_region
          %s162 = sand.u32 %s56, 1
          %s163 = scalar_lea.sflag [#allocation6], %s162
          %s164 = sand.u32 %s56, 1
          %s165 = smul.addr %s164, 512
          %s166 = scalar_lea.vmem [#allocation5], %s165
          %s167 = smul.u32 32, %s20
          %s169 = ssub.s32 8192, 8192
          %170 = vsyncadd %s163, %s169
          %s171 = smul.addr %s167, 2
          %s172 = smul.addr %s171, 128
          %s173 = scalar_lea.hbm %s1, %s172
          %s174 = sshll.u32 %s166, 4
          %s175 = int_to_ptr.vmem [resolvable:$true] %s174
          %180 = dma.hbm_to_vmem [thread:$0]  %s173, 8192, %s175, %s163, 256, 256, 16
        $region24: #{tpu_custom_call.1} parent=15 // pred_fallthru
          _
      $region16: #{tpu_custom_call.1} parent=5 // pred_fallthru
        _
      %p181 = scmp.le.s32.totalorder 1, %s20
      %p182 = scmp.lt.s32.totalorder %s20, 4
      %p183 = pnand %p181, %p182
      %p184 = pneg %p183
      // Predicated region
      $region25: #{tpu_custom_call.1} parent=5 // pred_check
        _
      $region26: #{tpu_custom_call.1} parent=5 // pred_check_branch
        %186 = sbr.rel (%p183) target = $region28
      $region27: #{tpu_custom_call.1} parent=5 // pred_region
        %s187 = ssub.s32 %s20, 1
        %s188 = sand.u32 %s33, 1
        %s189 = scalar_lea.sflag [#allocation3], %s188
        %s190 = sand.u32 %s33, 1
        %s191 = smul.addr %s190, 256
        %s192 = scalar_lea.vmem [#allocation2], %s191
        // Predicated region
        $region29: #{tpu_custom_call.1} parent=27 // pred_check
          %p193 = pneg %p46
        $region30: #{tpu_custom_call.1} parent=27 // pred_check_branch
          %195 = sbr.rel (%p193) target = $region32
        $region31: #{tpu_custom_call.1} parent=27 // pred_region
          %196 = dma.done %s189, 4096
        $region32: #{tpu_custom_call.1} parent=27 // pred_fallthru
          _
        %s197 = sand.u32 %s59, 1
        %s198 = scalar_lea.sflag [#allocation6], %s197
        %s199 = sand.u32 %s59, 1
        %s200 = smul.addr %s199, 512
        %s201 = scalar_lea.vmem [#allocation5], %s200
        // Predicated region
        $region33: #{tpu_custom_call.1} parent=27 // pred_check
          %p202 = pneg %p72
        $region34: #{tpu_custom_call.1} parent=27 // pred_check_branch
          %204 = sbr.rel (%p202) target = $region36
        $region35: #{tpu_custom_call.1} parent=27 // pred_region
          %205 = dma.done %s198, 8192
        $region36: #{tpu_custom_call.1} parent=27 // pred_fallthru
          _
        %s206 = sand.u32 %s33, 1
        %s207 = scalar_lea.sflag [#allocation3], %s206
        %s208 = sand.u32 %s33, 1
        %s209 = smul.addr %s208, 256
        %s210 = scalar_lea.vmem [#allocation2], %s209
        %p211 = pneg %p46
        %p212 = pneg %p43
        %s213 = sand.u32 %s59, 1
        %s214 = scalar_lea.sflag [#allocation6], %s213
        %s215 = sand.u32 %s59, 1
        %s216 = smul.addr %s215, 512
        %s217 = scalar_lea.vmem [#allocation5], %s216
        %p218 = pneg %p72
        %p219 = pneg %p69
        %p220 = pneg %p98
        %p221 = pneg %p95
        %s222 = sand.u32 %s85, 1
        %s223 = scalar_lea.sflag [#allocation4], %s222
        %s224 = sand.u32 %s85, 1
        %s225 = smul.addr %s224, 256
        %s226 = scalar_lea.vmem [#allocation7], %s225
        %p227 = pneg %p119
        %p228 = pneg %p116
        %s229 = smul.u32 32, %s25
        %s230 = smul.u32 32, %s25
        %s231 = smul.u32 32, %s25
        %v232 = vld [vmem:[%s192] sm:$0xff]
        %v233 = vld [vmem:[%s192 + $0x8] sm:$0xff]
        %v234 = vld [vmem:[%s192 + $0x10] sm:$0xff]
        %v235 = vld [vmem:[%s192 + $0x18] sm:$0xff]
        %v236 = vld [vmem:[%s192 + $0x20] sm:$0xff]
        %v237 = vld [vmem:[%s192 + $0x28] sm:$0xff]
        %v238 = vld [vmem:[%s192 + $0x30] sm:$0xff]
        %v239 = vld [vmem:[%s192 + $0x38] sm:$0xff]
        %v240 = vld [vmem:[%s192 + $0x40] sm:$0xff]
        %v241 = vld [vmem:[%s192 + $0x48] sm:$0xff]
        %v242 = vld [vmem:[%s192 + $0x50] sm:$0xff]
        %v243 = vld [vmem:[%s192 + $0x58] sm:$0xff]
        %v244 = vld [vmem:[%s192 + $0x60] sm:$0xff]
        %v245 = vld [vmem:[%s192 + $0x68] sm:$0xff]
        %v246 = vld [vmem:[%s192 + $0x70] sm:$0xff]
        %v247 = vld [vmem:[%s192 + $0x78] sm:$0xff]
        %v248 = vld [vmem:[%s192 + $0x80] sm:$0xff]
        %v249 = vld [vmem:[%s192 + $0x88] sm:$0xff]
        %v250 = vld [vmem:[%s192 + $0x90] sm:$0xff]
        %v251 = vld [vmem:[%s192 + $0x98] sm:$0xff]
        %v252 = vld [vmem:[%s192 + $0xa0] sm:$0xff]
        %v253 = vld [vmem:[%s192 + $0xa8] sm:$0xff]
        %v254 = vld [vmem:[%s192 + $0xb0] sm:$0xff]
        %v255 = vld [vmem:[%s192 + $0xb8] sm:$0xff]
        %v256 = vld [vmem:[%s192 + $0xc0] sm:$0xff]
        %v257 = vld [vmem:[%s192 + $0xc8] sm:$0xff]
        %v258 = vld [vmem:[%s192 + $0xd0] sm:$0xff]
        %v259 = vld [vmem:[%s192 + $0xd8] sm:$0xff]
        %v260 = vld [vmem:[%s192 + $0xe0] sm:$0xff]
        %v261 = vld [vmem:[%s192 + $0xe8] sm:$0xff]
        %v262 = vld [vmem:[%s192 + $0xf0] sm:$0xff]
        %v263 = vld [vmem:[%s192 + $0xf8] sm:$0xff]
        %v264 = vmul.f32 %v232, 2.0
        %v265 = vmul.f32 %v233, 2.0
        %v266 = vmul.f32 %v234, 2.0
        %v267 = vmul.f32 %v235, 2.0
        %v268 = vmul.f32 %v236, 2.0
        %v269 = vmul.f32 %v237, 2.0
        %v270 = vmul.f32 %v238, 2.0
        %v271 = vmul.f32 %v239, 2.0
        %v272 = vmul.f32 %v240, 2.0
        %v273 = vmul.f32 %v241, 2.0
        %v274 = vmul.f32 %v242, 2.0
        %v275 = vmul.f32 %v243, 2.0
        %v276 = vmul.f32 %v244, 2.0
        %v277 = vmul.f32 %v245, 2.0
        %v278 = vmul.f32 %v246, 2.0
        %v279 = vmul.f32 %v247, 2.0
        %v280 = vmul.f32 %v248, 2.0
        %v281 = vmul.f32 %v249, 2.0
        %v282 = vmul.f32 %v250, 2.0
        %v283 = vmul.f32 %v251, 2.0
        %v284 = vmul.f32 %v252, 2.0
        %v285 = vmul.f32 %v253, 2.0
        %v286 = vmul.f32 %v254, 2.0
        %v287 = vmul.f32 %v255, 2.0
        %v288 = vmul.f32 %v256, 2.0
        %v289 = vmul.f32 %v257, 2.0
        %v290 = vmul.f32 %v258, 2.0
        %v291 = vmul.f32 %v259, 2.0
        %v292 = vmul.f32 %v260, 2.0
        %v293 = vmul.f32 %v261, 2.0
        %v294 = vmul.f32 %v262, 2.0
        %v295 = vmul.f32 %v263, 2.0
        %296 = vmax.xlane.f32.xlu0 %v264
        %v297 = vpop.xlane.xlu0 %296
        %298 = vmax.xlane.f32.xlu0 %v265
        %v299 = vpop.xlane.xlu0 %298
        %300 = vmax.xlane.f32.xlu0 %v266
        %v301 = vpop.xlane.xlu0 %300
        %302 = vmax.xlane.f32.xlu0 %v267
        %v303 = vpop.xlane.xlu0 %302
        %304 = vmax.xlane.f32.xlu0 %v268
        %v305 = vpop.xlane.xlu0 %304
        %306 = vmax.xlane.f32.xlu0 %v269
        %v307 = vpop.xlane.xlu0 %306
        %308 = vmax.xlane.f32.xlu0 %v270
        %v309 = vpop.xlane.xlu0 %308
        %310 = vmax.xlane.f32.xlu0 %v271
        %v311 = vpop.xlane.xlu0 %310
        %312 = vmax.xlane.f32.xlu0 %v272
        %v313 = vpop.xlane.xlu0 %312
        %314 = vmax.xlane.f32.xlu0 %v273
        %v315 = vpop.xlane.xlu0 %314
        %316 = vmax.xlane.f32.xlu0 %v274
        %v317 = vpop.xlane.xlu0 %316
        %318 = vmax.xlane.f32.xlu0 %v275
        %v319 = vpop.xlane.xlu0 %318
        %320 = vmax.xlane.f32.xlu0 %v276
        %v321 = vpop.xlane.xlu0 %320
        %322 = vmax.xlane.f32.xlu0 %v277
        %v323 = vpop.xlane.xlu0 %322
        %324 = vmax.xlane.f32.xlu0 %v278
        %v325 = vpop.xlane.xlu0 %324
        %326 = vmax.xlane.f32.xlu0 %v279
        %v327 = vpop.xlane.xlu0 %326
        %328 = vmax.xlane.f32.xlu0 %v280
        %v329 = vpop.xlane.xlu0 %328
        %330 = vmax.xlane.f32.xlu0 %v281
        %v331 = vpop.xlane.xlu0 %330
        %332 = vmax.xlane.f32.xlu0 %v282
        %v333 = vpop.xlane.xlu0 %332
        %334 = vmax.xlane.f32.xlu0 %v283
        %v335 = vpop.xlane.xlu0 %334
        %336 = vmax.xlane.f32.xlu0 %v284
        %v337 = vpop.xlane.xlu0 %336
        %338 = vmax.xlane.f32.xlu0 %v285
        %v339 = vpop.xlane.xlu0 %338
        %340 = vmax.xlane.f32.xlu0 %v286
        %v341 = vpop.xlane.xlu0 %340
        %342 = vmax.xlane.f32.xlu0 %v287
        %v343 = vpop.xlane.xlu0 %342
        %344 = vmax.xlane.f32.xlu0 %v288
        %v345 = vpop.xlane.xlu0 %344
        %346 = vmax.xlane.f32.xlu0 %v289
        %v347 = vpop.xlane.xlu0 %346
        %348 = vmax.xlane.f32.xlu0 %v290
        %v349 = vpop.xlane.xlu0 %348
        %350 = vmax.xlane.f32.xlu0 %v291
        %v351 = vpop.xlane.xlu0 %350
        %352 = vmax.xlane.f32.xlu0 %v292
        %v353 = vpop.xlane.xlu0 %352
        %354 = vmax.xlane.f32.xlu0 %v293
        %v355 = vpop.xlane.xlu0 %354
        %356 = vmax.xlane.f32.xlu0 %v294
        %v357 = vpop.xlane.xlu0 %356
        %358 = vmax.xlane.f32.xlu0 %v295
        %v359 = vpop.xlane.xlu0 %358
        %v360 = vsub.f32 %v264, %v297
        %v361 = vsub.f32 %v265, %v299
        %v362 = vsub.f32 %v266, %v301
        %v363 = vsub.f32 %v267, %v303
        %v364 = vsub.f32 %v268, %v305
        %v365 = vsub.f32 %v269, %v307
        %v366 = vsub.f32 %v270, %v309
        %v367 = vsub.f32 %v271, %v311
        %v368 = vsub.f32 %v272, %v313
        %v369 = vsub.f32 %v273, %v315
        %v370 = vsub.f32 %v274, %v317
        %v371 = vsub.f32 %v275, %v319
        %v372 = vsub.f32 %v276, %v321
        %v373 = vsub.f32 %v277, %v323
        %v374 = vsub.f32 %v278, %v325
        %v375 = vsub.f32 %v279, %v327
        %v376 = vsub.f32 %v280, %v329
        %v377 = vsub.f32 %v281, %v331
        %v378 = vsub.f32 %v282, %v333
        %v379 = vsub.f32 %v283, %v335
        %v380 = vsub.f32 %v284, %v337
        %v381 = vsub.f32 %v285, %v339
        %v382 = vsub.f32 %v286, %v341
        %v383 = vsub.f32 %v287, %v343
        %v384 = vsub.f32 %v288, %v345
        %v385 = vsub.f32 %v289, %v347
        %v386 = vsub.f32 %v290, %v349
        %v387 = vsub.f32 %v291, %v351
        %v388 = vsub.f32 %v292, %v353
        %v389 = vsub.f32 %v293, %v355
        %v390 = vsub.f32 %v294, %v357
        %v391 = vsub.f32 %v295, %v359
        %v392 = vmul.f32 %v360, 1.442695
        %v393 = vpow.pop %v392
        %v394 = vmul.f32 %v361, 1.442695
        %v395 = vpow.pop %v394
        %v396 = vmul.f32 %v362, 1.442695
        %v397 = vpow.pop %v396
        %v398 = vmul.f32 %v363, 1.442695
        %v399 = vpow.pop %v398
        %v400 = vmul.f32 %v364, 1.442695
        %v401 = vpow.pop %v400
        %v402 = vmul.f32 %v365, 1.442695
        %v403 = vpow.pop %v402
        %v404 = vmul.f32 %v366, 1.442695
        %v405 = vpow.pop %v404
        %v406 = vmul.f32 %v367, 1.442695
        %v407 = vpow.pop %v406
        %v408 = vmul.f32 %v368, 1.442695
        %v409 = vpow.pop %v408
        %v410 = vmul.f32 %v369, 1.442695
        %v411 = vpow.pop %v410
        %v412 = vmul.f32 %v370, 1.442695
        %v413 = vpow.pop %v412
        %v414 = vmul.f32 %v371, 1.442695
        %v415 = vpow.pop %v414
        %v416 = vmul.f32 %v372, 1.442695
        %v417 = vpow.pop %v416
        %v418 = vmul.f32 %v373, 1.442695
        %v419 = vpow.pop %v418
        %v420 = vmul.f32 %v374, 1.442695
        %v421 = vpow.pop %v420
        %v422 = vmul.f32 %v375, 1.442695
        %v423 = vpow.pop %v422
        %v424 = vmul.f32 %v376, 1.442695
        %v425 = vpow.pop %v424
        %v426 = vmul.f32 %v377, 1.442695
        %v427 = vpow.pop %v426
        %v428 = vmul.f32 %v378, 1.442695
        %v429 = vpow.pop %v428
        %v430 = vmul.f32 %v379, 1.442695
        %v431 = vpow.pop %v430
        %v432 = vmul.f32 %v380, 1.442695
        %v433 = vpow.pop %v432
        %v434 = vmul.f32 %v381, 1.442695
        %v435 = vpow.pop %v434
        %v436 = vmul.f32 %v382, 1.442695
        %v437 = vpow.pop %v436
        %v438 = vmul.f32 %v383, 1.442695
        %v439 = vpow.pop %v438
        %v440 = vmul.f32 %v384, 1.442695
        %v441 = vpow.pop %v440
        %v442 = vmul.f32 %v385, 1.442695
        %v443 = vpow.pop %v442
        %v444 = vmul.f32 %v386, 1.442695
        %v445 = vpow.pop %v444
        %v446 = vmul.f32 %v387, 1.442695
        %v447 = vpow.pop %v446
        %v448 = vmul.f32 %v388, 1.442695
        %v449 = vpow.pop %v448
        %v450 = vmul.f32 %v389, 1.442695
        %v451 = vpow.pop %v450
        %v452 = vmul.f32 %v390, 1.442695
        %v453 = vpow.pop %v452
        %v454 = vmul.f32 %v391, 1.442695
        %v455 = vpow.pop %v454
        %456 = vadd.xlane.f32.xlu0 %v393
        %v457 = vpop.xlane.xlu0 %456
        %458 = vadd.xlane.f32.xlu0 %v395
        %v459 = vpop.xlane.xlu0 %458
        %460 = vadd.xlane.f32.xlu0 %v397
        %v461 = vpop.xlane.xlu0 %460
        %462 = vadd.xlane.f32.xlu0 %v399
        %v463 = vpop.xlane.xlu0 %462
        %464 = vadd.xlane.f32.xlu0 %v401
        %v465 = vpop.xlane.xlu0 %464
        %466 = vadd.xlane.f32.xlu0 %v403
        %v467 = vpop.xlane.xlu0 %466
        %468 = vadd.xlane.f32.xlu0 %v405
        %v469 = vpop.xlane.xlu0 %468
        %470 = vadd.xlane.f32.xlu0 %v407
        %v471 = vpop.xlane.xlu0 %470
        %472 = vadd.xlane.f32.xlu0 %v409
        %v473 = vpop.xlane.xlu0 %472
        %474 = vadd.xlane.f32.xlu0 %v411
        %v475 = vpop.xlane.xlu0 %474
        %476 = vadd.xlane.f32.xlu0 %v413
        %v477 = vpop.xlane.xlu0 %476
        %478 = vadd.xlane.f32.xlu0 %v415
        %v479 = vpop.xlane.xlu0 %478
        %480 = vadd.xlane.f32.xlu0 %v417
        %v481 = vpop.xlane.xlu0 %480
        %482 = vadd.xlane.f32.xlu0 %v419
        %v483 = vpop.xlane.xlu0 %482
        %484 = vadd.xlane.f32.xlu0 %v421
        %v485 = vpop.xlane.xlu0 %484
        %486 = vadd.xlane.f32.xlu0 %v423
        %v487 = vpop.xlane.xlu0 %486
        %488 = vadd.xlane.f32.xlu0 %v425
        %v489 = vpop.xlane.xlu0 %488
        %490 = vadd.xlane.f32.xlu0 %v427
        %v491 = vpop.xlane.xlu0 %490
        %492 = vadd.xlane.f32.xlu0 %v429
        %v493 = vpop.xlane.xlu0 %492
        %494 = vadd.xlane.f32.xlu0 %v431
        %v495 = vpop.xlane.xlu0 %494
        %496 = vadd.xlane.f32.xlu0 %v433
        %v497 = vpop.xlane.xlu0 %496
        %498 = vadd.xlane.f32.xlu0 %v435
        %v499 = vpop.xlane.xlu0 %498
        %500 = vadd.xlane.f32.xlu0 %v437
        %v501 = vpop.xlane.xlu0 %500
        %502 = vadd.xlane.f32.xlu0 %v439
        %v503 = vpop.xlane.xlu0 %502
        %504 = vadd.xlane.f32.xlu0 %v441
        %v505 = vpop.xlane.xlu0 %504
        %506 = vadd.xlane.f32.xlu0 %v443
        %v507 = vpop.xlane.xlu0 %506
        %508 = vadd.xlane.f32.xlu0 %v445
        %v509 = vpop.xlane.xlu0 %508
        %510 = vadd.xlane.f32.xlu0 %v447
        %v511 = vpop.xlane.xlu0 %510
        %512 = vadd.xlane.f32.xlu0 %v449
        %v513 = vpop.xlane.xlu0 %512
        %514 = vadd.xlane.f32.xlu0 %v451
        %v515 = vpop.xlane.xlu0 %514
        %516 = vadd.xlane.f32.xlu0 %v453
        %v517 = vpop.xlane.xlu0 %516
        %518 = vadd.xlane.f32.xlu0 %v455
        %v519 = vpop.xlane.xlu0 %518
        %v520 = vrcp.pop %v457
        %v521 = vmul.f32 %v393, %v520
        %v522 = vrcp.pop %v459
        %v523 = vmul.f32 %v395, %v522
        %v524 = vrcp.pop %v461
        %v525 = vmul.f32 %v397, %v524
        %v526 = vrcp.pop %v463
        %v527 = vmul.f32 %v399, %v526
        %v528 = vrcp.pop %v465
        %v529 = vmul.f32 %v401, %v528
        %v530 = vrcp.pop %v467
        %v531 = vmul.f32 %v403, %v530
        %v532 = vrcp.pop %v469
        %v533 = vmul.f32 %v405, %v532
        %v534 = vrcp.pop %v471
        %v535 = vmul.f32 %v407, %v534
        %v536 = vrcp.pop %v473
        %v537 = vmul.f32 %v409, %v536
        %v538 = vrcp.pop %v475
        %v539 = vmul.f32 %v411, %v538
        %v540 = vrcp.pop %v477
        %v541 = vmul.f32 %v413, %v540
        %v542 = vrcp.pop %v479
        %v543 = vmul.f32 %v415, %v542
        %v544 = vrcp.pop %v481
        %v545 = vmul.f32 %v417, %v544
        %v546 = vrcp.pop %v483
        %v547 = vmul.f32 %v419, %v546
        %v548 = vrcp.pop %v485
        %v549 = vmul.f32 %v421, %v548
        %v550 = vrcp.pop %v487
        %v551 = vmul.f32 %v423, %v550
        %v552 = vrcp.pop %v489
        %v553 = vmul.f32 %v425, %v552
        %v554 = vrcp.pop %v491
        %v555 = vmul.f32 %v427, %v554
        %v556 = vrcp.pop %v493
        %v557 = vmul.f32 %v429, %v556
        %v558 = vrcp.pop %v495
        %v559 = vmul.f32 %v431, %v558
        %v560 = vrcp.pop %v497
        %v561 = vmul.f32 %v433, %v560
        %v562 = vrcp.pop %v499
        %v563 = vmul.f32 %v435, %v562
        %v564 = vrcp.pop %v501
        %v565 = vmul.f32 %v437, %v564
        %v566 = vrcp.pop %v503
        %v567 = vmul.f32 %v439, %v566
        %v568 = vrcp.pop %v505
        %v569 = vmul.f32 %v441, %v568
        %v570 = vrcp.pop %v507
        %v571 = vmul.f32 %v443, %v570
        %v572 = vrcp.pop %v509
        %v573 = vmul.f32 %v445, %v572
        %v574 = vrcp.pop %v511
        %v575 = vmul.f32 %v447, %v574
        %v576 = vrcp.pop %v513
        %v577 = vmul.f32 %v449, %v576
        %v578 = vrcp.pop %v515
        %v579 = vmul.f32 %v451, %v578
        %v580 = vrcp.pop %v517
        %v581 = vmul.f32 %v453, %v580
        %v582 = vrcp.pop %v519
        %v583 = vmul.f32 %v455, %v582
        %584 = vst [vmem:[%s226] sm:$0xff] %v521
        %585 = vst [vmem:[%s226 + $0x8] sm:$0xff] %v523
        %586 = vst [vmem:[%s226 + $0x10] sm:$0xff] %v525
        %587 = vst [vmem:[%s226 + $0x18] sm:$0xff] %v527
        %588 = vst [vmem:[%s226 + $0x20] sm:$0xff] %v529
        %589 = vst [vmem:[%s226 + $0x28] sm:$0xff] %v531
        %590 = vst [vmem:[%s226 + $0x30] sm:$0xff] %v533
        %591 = vst [vmem:[%s226 + $0x38] sm:$0xff] %v535
        %592 = vst [vmem:[%s226 + $0x40] sm:$0xff] %v537
        %593 = vst [vmem:[%s226 + $0x48] sm:$0xff] %v539
        %594 = vst [vmem:[%s226 + $0x50] sm:$0xff] %v541
        %595 = vst [vmem:[%s226 + $0x58] sm:$0xff] %v543
        %596 = vst [vmem:[%s226 + $0x60] sm:$0xff] %v545
        %597 = vst [vmem:[%s226 + $0x68] sm:$0xff] %v547
        %598 = vst [vmem:[%s226 + $0x70] sm:$0xff] %v549
        %599 = vst [vmem:[%s226 + $0x78] sm:$0xff] %v551
        %600 = vst [vmem:[%s226 + $0x80] sm:$0xff] %v553
        %601 = vst [vmem:[%s226 + $0x88] sm:$0xff] %v555
        %602 = vst [vmem:[%s226 + $0x90] sm:$0xff] %v557
        %603 = vst [vmem:[%s226 + $0x98] sm:$0xff] %v559
        %604 = vst [vmem:[%s226 + $0xa0] sm:$0xff] %v561
        %605 = vst [vmem:[%s226 + $0xa8] sm:$0xff] %v563
        %606 = vst [vmem:[%s226 + $0xb0] sm:$0xff] %v565
        %607 = vst [vmem:[%s226 + $0xb8] sm:$0xff] %v567
        %608 = vst [vmem:[%s226 + $0xc0] sm:$0xff] %v569
        %609 = vst [vmem:[%s226 + $0xc8] sm:$0xff] %v571
        %610 = vst [vmem:[%s226 + $0xd0] sm:$0xff] %v573
        %611 = vst [vmem:[%s226 + $0xd8] sm:$0xff] %v575
        %612 = vst [vmem:[%s226 + $0xe0] sm:$0xff] %v577
        %613 = vst [vmem:[%s226 + $0xe8] sm:$0xff] %v579
        %614 = vst [vmem:[%s226 + $0xf0] sm:$0xff] %v581
        %615 = vst [vmem:[%s226 + $0xf8] sm:$0xff] %v583
        %p616 = scmp.eq.s32.totalorder %s25, 0
        // Predicated region
        $region37: #{tpu_custom_call.1} parent=27 // pred_check
          %p617 = pneg %p616
        $region38: #{tpu_custom_call.1} parent=27 // pred_check_branch
          %619 = sbr.rel (%p617) target = $region40
        $region39: #{tpu_custom_call.1} parent=27 // pred_region
          %620 = vst [vmem:[#allocation8] sm:$0xff] 0.0
          %621 = vst [vmem:[#allocation8 + $0x8] sm:$0xff] 0.0
          %622 = vst [vmem:[#allocation8 + $0x10] sm:$0xff] 0.0
          %623 = vst [vmem:[#allocation8 + $0x18] sm:$0xff] 0.0
          %624 = vst [vmem:[#allocation8 + $0x20] sm:$0xff] 0.0
          %625 = vst [vmem:[#allocation8 + $0x28] sm:$0xff] 0.0
          %626 = vst [vmem:[#allocation8 + $0x30] sm:$0xff] 0.0
          %627 = vst [vmem:[#allocation8 + $0x38] sm:$0xff] 0.0
          %628 = vst [vmem:[#allocation8 + $0x40] sm:$0xff] 0.0
          %629 = vst [vmem:[#allocation8 + $0x48] sm:$0xff] 0.0
          %630 = vst [vmem:[#allocation8 + $0x50] sm:$0xff] 0.0
          %631 = vst [vmem:[#allocation8 + $0x58] sm:$0xff] 0.0
          %632 = vst [vmem:[#allocation8 + $0x60] sm:$0xff] 0.0
          %633 = vst [vmem:[#allocation8 + $0x68] sm:$0xff] 0.0
          %634 = vst [vmem:[#allocation8 + $0x70] sm:$0xff] 0.0
          %635 = vst [vmem:[#allocation8 + $0x78] sm:$0xff] 0.0
          %636 = vst [vmem:[#allocation8 + $0x80] sm:$0xff] 0.0
          %637 = vst [vmem:[#allocation8 + $0x88] sm:$0xff] 0.0
          %638 = vst [vmem:[#allocation8 + $0x90] sm:$0xff] 0.0
          %639 = vst [vmem:[#allocation8 + $0x98] sm:$0xff] 0.0
          %640 = vst [vmem:[#allocation8 + $0xa0] sm:$0xff] 0.0
          %641 = vst [vmem:[#allocation8 + $0xa8] sm:$0xff] 0.0
          %642 = vst [vmem:[#allocation8 + $0xb0] sm:$0xff] 0.0
          %643 = vst [vmem:[#allocation8 + $0xb8] sm:$0xff] 0.0
          %644 = vst [vmem:[#allocation8 + $0xc0] sm:$0xff] 0.0
          %645 = vst [vmem:[#allocation8 + $0xc8] sm:$0xff] 0.0
          %646 = vst [vmem:[#allocation8 + $0xd0] sm:$0xff] 0.0
          %647 = vst [vmem:[#allocation8 + $0xd8] sm:$0xff] 0.0
          %648 = vst [vmem:[#allocation8 + $0xe0] sm:$0xff] 0.0
          %649 = vst [vmem:[#allocation8 + $0xe8] sm:$0xff] 0.0
          %650 = vst [vmem:[#allocation8 + $0xf0] sm:$0xff] 0.0
          %651 = vst [vmem:[#allocation8 + $0xf8] sm:$0xff] 0.0
        $region40: #{tpu_custom_call.1} parent=27 // pred_fallthru
          _
        %v652 = vld [vmem:[#allocation8] sm:$0xff]
        %v653 = vld [vmem:[#allocation8 + $0x8] sm:$0xff]
        %v654 = vld [vmem:[#allocation8 + $0x10] sm:$0xff]
        %v655 = vld [vmem:[#allocation8 + $0x18] sm:$0xff]
        %v656 = vld [vmem:[#allocation8 + $0x20] sm:$0xff]
        %v657 = vld [vmem:[#allocation8 + $0x28] sm:$0xff]
        %v658 = vld [vmem:[#allocation8 + $0x30] sm:$0xff]
        %v659 = vld [vmem:[#allocation8 + $0x38] sm:$0xff]
        %v660 = vld [vmem:[#allocation8 + $0x40] sm:$0xff]
        %v661 = vld [vmem:[#allocation8 + $0x48] sm:$0xff]
        %v662 = vld [vmem:[#allocation8 + $0x50] sm:$0xff]
        %v663 = vld [vmem:[#allocation8 + $0x58] sm:$0xff]
        %v664 = vld [vmem:[#allocation8 + $0x60] sm:$0xff]
        %v665 = vld [vmem:[#allocation8 + $0x68] sm:$0xff]
        %v666 = vld [vmem:[#allocation8 + $0x70] sm:$0xff]
        %v667 = vld [vmem:[#allocation8 + $0x78] sm:$0xff]
        %v668 = vld [vmem:[#allocation8 + $0x80] sm:$0xff]
        %v669 = vld [vmem:[#allocation8 + $0x88] sm:$0xff]
        %v670 = vld [vmem:[#allocation8 + $0x90] sm:$0xff]
        %v671 = vld [vmem:[#allocation8 + $0x98] sm:$0xff]
        %v672 = vld [vmem:[#allocation8 + $0xa0] sm:$0xff]
        %v673 = vld [vmem:[#allocation8 + $0xa8] sm:$0xff]
        %v674 = vld [vmem:[#allocation8 + $0xb0] sm:$0xff]
        %v675 = vld [vmem:[#allocation8 + $0xb8] sm:$0xff]
        %v676 = vld [vmem:[#allocation8 + $0xc0] sm:$0xff]
        %v677 = vld [vmem:[#allocation8 + $0xc8] sm:$0xff]
        %v678 = vld [vmem:[#allocation8 + $0xd0] sm:$0xff]
        %v679 = vld [vmem:[#allocation8 + $0xd8] sm:$0xff]
        %v680 = vld [vmem:[#allocation8 + $0xe0] sm:$0xff]
        %v681 = vld [vmem:[#allocation8 + $0xe8] sm:$0xff]
        %v682 = vld [vmem:[#allocation8 + $0xf0] sm:$0xff]
        %v683 = vld [vmem:[#allocation8 + $0xf8] sm:$0xff]
        %v684 = vld [vmem:[%s201] sm:$0xff]
        %v685 = vld [vmem:[%s201 + $0x8] sm:$0xff]
        %v686 = vld [vmem:[%s201 + $0x10] sm:$0xff]
        %v687 = vld [vmem:[%s201 + $0x18] sm:$0xff]
        %v688 = vld [vmem:[%s201 + $0x20] sm:$0xff]
        %v689 = vld [vmem:[%s201 + $0x28] sm:$0xff]
        %v690 = vld [vmem:[%s201 + $0x30] sm:$0xff]
        %v691 = vld [vmem:[%s201 + $0x38] sm:$0xff]
        %v692 = vld [vmem:[%s201 + $0x40] sm:$0xff]
        %v693 = vld [vmem:[%s201 + $0x48] sm:$0xff]
        %v694 = vld [vmem:[%s201 + $0x50] sm:$0xff]
        %v695 = vld [vmem:[%s201 + $0x58] sm:$0xff]
        %v696 = vld [vmem:[%s201 + $0x60] sm:$0xff]
        %v697 = vld [vmem:[%s201 + $0x68] sm:$0xff]
        %v698 = vld [vmem:[%s201 + $0x70] sm:$0xff]
        %v699 = vld [vmem:[%s201 + $0x78] sm:$0xff]
        %v700 = vld [vmem:[%s201 + $0x80] sm:$0xff]
        %v701 = vld [vmem:[%s201 + $0x88] sm:$0xff]
        %v702 = vld [vmem:[%s201 + $0x90] sm:$0xff]
        %v703 = vld [vmem:[%s201 + $0x98] sm:$0xff]
        %v704 = vld [vmem:[%s201 + $0xa0] sm:$0xff]
        %v705 = vld [vmem:[%s201 + $0xa8] sm:$0xff]
        %v706 = vld [vmem:[%s201 + $0xb0] sm:$0xff]
        %v707 = vld [vmem:[%s201 + $0xb8] sm:$0xff]
        %v708 = vld [vmem:[%s201 + $0xc0] sm:$0xff]
        %v709 = vld [vmem:[%s201 + $0xc8] sm:$0xff]
        %v710 = vld [vmem:[%s201 + $0xd0] sm:$0xff]
        %v711 = vld [vmem:[%s201 + $0xd8] sm:$0xff]
        %v712 = vld [vmem:[%s201 + $0xe0] sm:$0xff]
        %v713 = vld [vmem:[%s201 + $0xe8] sm:$0xff]
        %v714 = vld [vmem:[%s201 + $0xf0] sm:$0xff]
        %v715 = vld [vmem:[%s201 + $0xf8] sm:$0xff]
        %v716 = vld [vmem:[%s201 + $0x100] sm:$0xff]
        %v717 = vld [vmem:[%s201 + $0x108] sm:$0xff]
        %v718 = vld [vmem:[%s201 + $0x110] sm:$0xff]
        %v719 = vld [vmem:[%s201 + $0x118] sm:$0xff]
        %v720 = vld [vmem:[%s201 + $0x120] sm:$0xff]
        %v721 = vld [vmem:[%s201 + $0x128] sm:$0xff]
        %v722 = vld [vmem:[%s201 + $0x130] sm:$0xff]
        %v723 = vld [vmem:[%s201 + $0x138] sm:$0xff]
        %v724 = vld [vmem:[%s201 + $0x140] sm:$0xff]
        %v725 = vld [vmem:[%s201 + $0x148] sm:$0xff]
        %v726 = vld [vmem:[%s201 + $0x150] sm:$0xff]
        %v727 = vld [vmem:[%s201 + $0x158] sm:$0xff]
        %v728 = vld [vmem:[%s201 + $0x160] sm:$0xff]
        %v729 = vld [vmem:[%s201 + $0x168] sm:$0xff]
        %v730 = vld [vmem:[%s201 + $0x170] sm:$0xff]
        %v731 = vld [vmem:[%s201 + $0x178] sm:$0xff]
        %v732 = vld [vmem:[%s201 + $0x180] sm:$0xff]
        %v733 = vld [vmem:[%s201 + $0x188] sm:$0xff]
        %v734 = vld [vmem:[%s201 + $0x190] sm:$0xff]
        %v735 = vld [vmem:[%s201 + $0x198] sm:$0xff]
        %v736 = vld [vmem:[%s201 + $0x1a0] sm:$0xff]
        %v737 = vld [vmem:[%s201 + $0x1a8] sm:$0xff]
        %v738 = vld [vmem:[%s201 + $0x1b0] sm:$0xff]
        %v739 = vld [vmem:[%s201 + $0x1b8] sm:$0xff]
        %v740 = vld [vmem:[%s201 + $0x1c0] sm:$0xff]
        %v741 = vld [vmem:[%s201 + $0x1c8] sm:$0xff]
        %v742 = vld [vmem:[%s201 + $0x1d0] sm:$0xff]
        %v743 = vld [vmem:[%s201 + $0x1d8] sm:$0xff]
        %v744 = vld [vmem:[%s201 + $0x1e0] sm:$0xff]
        %v745 = vld [vmem:[%s201 + $0x1e8] sm:$0xff]
        %v746 = vld [vmem:[%s201 + $0x1f0] sm:$0xff]
        %v747 = vld [vmem:[%s201 + $0x1f8] sm:$0xff]
        %748 = vxpose.xlu0.b32.start [1/16] %v521, 128
        %749 = vxpose.xlu0.b32.cont [2/16] %v523, 128
        %750 = vxpose.xlu0.b32.cont [3/16] %v525, 128
        %751 = vxpose.xlu0.b32.cont [4/16] %v527, 128
        %752 = vxpose.xlu0.b32.cont [5/16] %v529, 128
        %753 = vxpose.xlu0.b32.cont [6/16] %v531, 128
        %754 = vxpose.xlu0.b32.cont [7/16] %v533, 128
        %755 = vxpose.xlu0.b32.cont [8/16] %v535, 128
        %756 = vxpose.xlu0.b32.cont [9/16] %v537, 128
        %757 = vxpose.xlu0.b32.cont [10/16] %v539, 128
        %758 = vxpose.xlu0.b32.cont [11/16] %v541, 128
        %759 = vxpose.xlu0.b32.cont [12/16] %v543, 128
        %760 = vxpose.xlu0.b32.cont [13/16] %v545, 128
        %761 = vxpose.xlu0.b32.cont [14/16] %v547, 128
        %762 = vxpose.xlu0.b32.cont [15/16] %v549, 128
        %763 = vxpose.xlu0.b32.end [16/16] %v551, 128
        %v764 = vpop.trf.xlu0
        %v765 = vpop.trf.xlu0
        %v766 = vpop.trf.xlu0
        %v767 = vpop.trf.xlu0
        %v768 = vpop.trf.xlu0
        %v769 = vpop.trf.xlu0
        %v770 = vpop.trf.xlu0
        %v771 = vpop.trf.xlu0
        %v772 = vpop.trf.xlu0
        %v773 = vpop.trf.xlu0
        %v774 = vpop.trf.xlu0
        %v775 = vpop.trf.xlu0
        %v776 = vpop.trf.xlu0
        %v777 = vpop.trf.xlu0
        %v778 = vpop.trf.xlu0
        %v779 = vpop.trf.xlu0
        %780 = vxpose.xlu0.b32.start [1/16] %v553, 128
        %781 = vxpose.xlu0.b32.cont [2/16] %v555, 128
        %782 = vxpose.xlu0.b32.cont [3/16] %v557, 128
        %783 = vxpose.xlu0.b32.cont [4/16] %v559, 128
        %784 = vxpose.xlu0.b32.cont [5/16] %v561, 128
        %785 = vxpose.xlu0.b32.cont [6/16] %v563, 128
        %786 = vxpose.xlu0.b32.cont [7/16] %v565, 128
        %787 = vxpose.xlu0.b32.cont [8/16] %v567, 128
        %788 = vxpose.xlu0.b32.cont [9/16] %v569, 128
        %789 = vxpose.xlu0.b32.cont [10/16] %v571, 128
        %790 = vxpose.xlu0.b32.cont [11/16] %v573, 128
        %791 = vxpose.xlu0.b32.cont [12/16] %v575, 128
        %792 = vxpose.xlu0.b32.cont [13/16] %v577, 128
        %793 = vxpose.xlu0.b32.cont [14/16] %v579, 128
        %794 = vxpose.xlu0.b32.cont [15/16] %v581, 128
        %795 = vxpose.xlu0.b32.end [16/16] %v583, 128
        %v796 = vpop.trf.xlu0
        %v797 = vpop.trf.xlu0
        %v798 = vpop.trf.xlu0
        %v799 = vpop.trf.xlu0
        %v800 = vpop.trf.xlu0
        %v801 = vpop.trf.xlu0
        %v802 = vpop.trf.xlu0
        %v803 = vpop.trf.xlu0
        %v804 = vpop.trf.xlu0
        %v805 = vpop.trf.xlu0
        %v806 = vpop.trf.xlu0
        %v807 = vpop.trf.xlu0
        %v808 = vpop.trf.xlu0
        %v809 = vpop.trf.xlu0
        %v810 = vpop.trf.xlu0
        %v811 = vpop.trf.xlu0
        %812 = vmatprep.subr.mxu0 %v715
        %813 = vmatpush1.msra.mxu0 %v714
        %814 = vmatprep.subr.mxu0 %v713
        %815 = vmatpush1.msra.mxu0 %v712
        %816 = vmatprep.subr.mxu0 %v711
        %817 = vmatpush1.msra.mxu0 %v710
        %818 = vmatprep.subr.mxu0 %v709
        %819 = vmatpush1.msra.mxu0 %v708
        %820 = vmatprep.subr.mxu0 %v707
        %821 = vmatpush1.msra.mxu0 %v706
        %822 = vmatprep.subr.mxu0 %v705
        %823 = vmatpush1.msra.mxu0 %v704
        %824 = vmatprep.subr.mxu0 %v703
        %825 = vmatpush1.msra.mxu0 %v702
        %826 = vmatprep.subr.mxu0 %v701
        %827 = vmatpush1.msra.mxu0 %v700
        %828 = vmatprep.subr.mxu0 %v699
        %829 = vmatpush1.msra.mxu0 %v698
        %830 = vmatprep.subr.mxu0 %v697
        %831 = vmatpush1.msra.mxu0 %v696
        %832 = vmatprep.subr.mxu0 %v695
        %833 = vmatpush1.msra.mxu0 %v694
        %834 = vmatprep.subr.mxu0 %v693
        %835 = vmatpush1.msra.mxu0 %v692
        %836 = vmatprep.subr.mxu0 %v691
        %837 = vmatpush1.msra.mxu0 %v690
        %838 = vmatprep.subr.mxu0 %v689
        %839 = vmatpush1.msra.mxu0 %v688
        %840 = vmatprep.subr.mxu0 %v687
        %841 = vmatpush1.msra.mxu0 %v686
        %842 = vmatprep.subr.mxu0 %v685
        %843 = vmatpush1.msra.mxu0 %v684
        %844 = vmatprep.subr.mxu0 %v747
        %845 = vmatpush2.msra.mxu0 %v746
        %846 = vmatprep.subr.mxu0 %v745
        %847 = vmatpush2.msra.mxu0 %v744
        %848 = vmatprep.subr.mxu0 %v743
        %849 = vmatpush2.msra.mxu0 %v742
        %850 = vmatprep.subr.mxu0 %v741
        %851 = vmatpush2.msra.mxu0 %v740
        %852 = vmatprep.subr.mxu0 %v739
        %853 = vmatpush2.msra.mxu0 %v738
        %854 = vmatprep.subr.mxu0 %v737
        %855 = vmatpush2.msra.mxu0 %v736
        %856 = vmatprep.subr.mxu0 %v735
        %857 = vmatpush2.msra.mxu0 %v734
        %858 = vmatprep.subr.mxu0 %v733
        %859 = vmatpush2.msra.mxu0 %v732
        %860 = vmatprep.subr.mxu0 %v731
        %861 = vmatpush2.msra.mxu0 %v730
        %862 = vmatprep.subr.mxu0 %v729
        %863 = vmatpush2.msra.mxu0 %v728
        %864 = vmatprep.subr.mxu0 %v727
        %865 = vmatpush2.msra.mxu0 %v726
        %866 = vmatprep.subr.mxu0 %v725
        %867 = vmatpush2.msra.mxu0 %v724
        %868 = vmatprep.subr.mxu0 %v723
        %869 = vmatpush2.msra.mxu0 %v722
        %870 = vmatprep.subr.mxu0 %v721
        %871 = vmatpush2.msra.mxu0 %v720
        %872 = vmatprep.subr.mxu0 %v719
        %873 = vmatpush2.msra.mxu0 %v718
        %874 = vmatprep.subr.mxu0 %v717
        %875 = vmatpush2.msra.mxu0 %v716
        %876 = vmatprep.mubr.f32.mxu0 %v796
        %877 = vmatmul.mubr.f32.gmra.mxu0 %v764
        %v878 = vpop.f32.mrf.mxu0
        %v879 = vadd.f32 0.0, %v878
        %v880 = vpop.f32.mrf.mxu0
        %v881 = vadd.f32 0.0, %v880
        %882 = vmatprep.mubr.f32.mxu0 %v797
        %883 = vmatmul.mubr.f32.gmra.mxu0 %v765
        %v884 = vpop.f32.mrf.mxu0
        %v885 = vadd.f32 0.0, %v884
        %v886 = vpop.f32.mrf.mxu0
        %v887 = vadd.f32 0.0, %v886
        %888 = vmatprep.mubr.f32.mxu0 %v798
        %889 = vmatmul.mubr.f32.gmra.mxu0 %v766
        %v890 = vpop.f32.mrf.mxu0
        %v891 = vadd.f32 0.0, %v890
        %v892 = vpop.f32.mrf.mxu0
        %v893 = vadd.f32 0.0, %v892
        %894 = vmatprep.mubr.f32.mxu0 %v799
        %895 = vmatmul.mubr.f32.gmra.mxu0 %v767
        %v896 = vpop.f32.mrf.mxu0
        %v897 = vadd.f32 0.0, %v896
        %v898 = vpop.f32.mrf.mxu0
        %v899 = vadd.f32 0.0, %v898
        %900 = vmatprep.mubr.f32.mxu0 %v800
        %901 = vmatmul.mubr.f32.gmra.mxu0 %v768
        %v902 = vpop.f32.mrf.mxu0
        %v903 = vadd.f32 0.0, %v902
        %v904 = vpop.f32.mrf.mxu0
        %v905 = vadd.f32 0.0, %v904
        %906 = vmatprep.mubr.f32.mxu0 %v801
        %907 = vmatmul.mubr.f32.gmra.mxu0 %v769
        %v908 = vpop.f32.mrf.mxu0
        %v909 = vadd.f32 0.0, %v908
        %v910 = vpop.f32.mrf.mxu0
        %v911 = vadd.f32 0.0, %v910
        %912 = vmatprep.mubr.f32.mxu0 %v802
        %913 = vmatmul.mubr.f32.gmra.mxu0 %v770
        %v914 = vpop.f32.mrf.mxu0
        %v915 = vadd.f32 0.0, %v914
        %v916 = vpop.f32.mrf.mxu0
        %v917 = vadd.f32 0.0, %v916
        %918 = vmatprep.mubr.f32.mxu0 %v803
        %919 = vmatmul.mubr.f32.gmra.mxu0 %v771
        %v920 = vpop.f32.mrf.mxu0
        %v921 = vadd.f32 0.0, %v920
        %v922 = vpop.f32.mrf.mxu0
        %v923 = vadd.f32 0.0, %v922
        %924 = vmatprep.mubr.f32.mxu0 %v804
        %925 = vmatmul.mubr.f32.gmra.mxu0 %v772
        %v926 = vpop.f32.mrf.mxu0
        %v927 = vadd.f32 0.0, %v926
        %v928 = vpop.f32.mrf.mxu0
        %v929 = vadd.f32 0.0, %v928
        %930 = vmatprep.mubr.f32.mxu0 %v805
        %931 = vmatmul.mubr.f32.gmra.mxu0 %v773
        %v932 = vpop.f32.mrf.mxu0
        %v933 = vadd.f32 0.0, %v932
        %v934 = vpop.f32.mrf.mxu0
        %v935 = vadd.f32 0.0, %v934
        %936 = vmatprep.mubr.f32.mxu0 %v806
        %937 = vmatmul.mubr.f32.gmra.mxu0 %v774
        %v938 = vpop.f32.mrf.mxu0
        %v939 = vadd.f32 0.0, %v938
        %v940 = vpop.f32.mrf.mxu0
        %v941 = vadd.f32 0.0, %v940
        %942 = vmatprep.mubr.f32.mxu0 %v807
        %943 = vmatmul.mubr.f32.gmra.mxu0 %v775
        %v944 = vpop.f32.mrf.mxu0
        %v945 = vadd.f32 0.0, %v944
        %v946 = vpop.f32.mrf.mxu0
        %v947 = vadd.f32 0.0, %v946
        %948 = vmatprep.mubr.f32.mxu0 %v808
        %949 = vmatmul.mubr.f32.gmra.mxu0 %v776
        %v950 = vpop.f32.mrf.mxu0
        %v951 = vadd.f32 0.0, %v950
        %v952 = vpop.f32.mrf.mxu0
        %v953 = vadd.f32 0.0, %v952
        %954 = vmatprep.mubr.f32.mxu0 %v809
        %955 = vmatmul.mubr.f32.gmra.mxu0 %v777
        %v956 = vpop.f32.mrf.mxu0
        %v957 = vadd.f32 0.0, %v956
        %v958 = vpop.f32.mrf.mxu0
        %v959 = vadd.f32 0.0, %v958
        %960 = vmatprep.mubr.f32.mxu0 %v810
        %961 = vmatmul.mubr.f32.gmra.mxu0 %v778
        %v962 = vpop.f32.mrf.mxu0
        %v963 = vadd.f32 0.0, %v962
        %v964 = vpop.f32.mrf.mxu0
        %v965 = vadd.f32 0.0, %v964
        %966 = vmatprep.mubr.f32.mxu0 %v811
        %967 = vmatmul.mubr.f32.gmra.mxu0 %v779
        %v968 = vpop.f32.mrf.mxu0
        %v969 = vadd.f32 0.0, %v968
        %v970 = vpop.f32.mrf.mxu0
        %v971 = vadd.f32 0.0, %v970
        %972 = vdwg.mxu0
        %v973 = vadd.f32 %v652, %v879
        %v974 = vadd.f32 %v653, %v881
        %v975 = vadd.f32 %v654, %v885
        %v976 = vadd.f32 %v655, %v887
        %v977 = vadd.f32 %v656, %v891
        %v978 = vadd.f32 %v657, %v893
        %v979 = vadd.f32 %v658, %v897
        %v980 = vadd.f32 %v659, %v899
        %v981 = vadd.f32 %v660, %v903
        %v982 = vadd.f32 %v661, %v905
        %v983 = vadd.f32 %v662, %v909
        %v984 = vadd.f32 %v663, %v911
        %v985 = vadd.f32 %v664, %v915
        %v986 = vadd.f32 %v665, %v917
        %v987 = vadd.f32 %v666, %v921
        %v988 = vadd.f32 %v667, %v923
        %v989 = vadd.f32 %v668, %v927
        %v990 = vadd.f32 %v669, %v929
        %v991 = vadd.f32 %v670, %v933
        %v992 = vadd.f32 %v671, %v935
        %v993 = vadd.f32 %v672, %v939
        %v994 = vadd.f32 %v673, %v941
        %v995 = vadd.f32 %v674, %v945
        %v996 = vadd.f32 %v675, %v947
        %v997 = vadd.f32 %v676, %v951
        %v998 = vadd.f32 %v677, %v953
        %v999 = vadd.f32 %v678, %v957
        %v1000 = vadd.f32 %v679, %v959
        %v1001 = vadd.f32 %v680, %v963
        %v1002 = vadd.f32 %v681, %v965
        %v1003 = vadd.f32 %v682, %v969
        %v1004 = vadd.f32 %v683, %v971
        %1005 = vst [vmem:[#allocation8] sm:$0xff] %v973
        %1006 = vst [vmem:[#allocation8 + $0x8] sm:$0xff] %v974
        %1007 = vst [vmem:[#allocation8 + $0x10] sm:$0xff] %v975
        %1008 = vst [vmem:[#allocation8 + $0x18] sm:$0xff] %v976
        %1009 = vst [vmem:[#allocation8 + $0x20] sm:$0xff] %v977
        %1010 = vst [vmem:[#allocation8 + $0x28] sm:$0xff] %v978
        %1011 = vst [vmem:[#allocation8 + $0x30] sm:$0xff] %v979
        %1012 = vst [vmem:[#allocation8 + $0x38] sm:$0xff] %v980
        %1013 = vst [vmem:[#allocation8 + $0x40] sm:$0xff] %v981
        %1014 = vst [vmem:[#allocation8 + $0x48] sm:$0xff] %v982
        %1015 = vst [vmem:[#allocation8 + $0x50] sm:$0xff] %v983
        %1016 = vst [vmem:[#allocation8 + $0x58] sm:$0xff] %v984
        %1017 = vst [vmem:[#allocation8 + $0x60] sm:$0xff] %v985
        %1018 = vst [vmem:[#allocation8 + $0x68] sm:$0xff] %v986
        %1019 = vst [vmem:[#allocation8 + $0x70] sm:$0xff] %v987
        %1020 = vst [vmem:[#allocation8 + $0x78] sm:$0xff] %v988
        %1021 = vst [vmem:[#allocation8 + $0x80] sm:$0xff] %v989
        %1022 = vst [vmem:[#allocation8 + $0x88] sm:$0xff] %v990
        %1023 = vst [vmem:[#allocation8 + $0x90] sm:$0xff] %v991
        %1024 = vst [vmem:[#allocation8 + $0x98] sm:$0xff] %v992
        %1025 = vst [vmem:[#allocation8 + $0xa0] sm:$0xff] %v993
        %1026 = vst [vmem:[#allocation8 + $0xa8] sm:$0xff] %v994
        %1027 = vst [vmem:[#allocation8 + $0xb0] sm:$0xff] %v995
        %1028 = vst [vmem:[#allocation8 + $0xb8] sm:$0xff] %v996
        %1029 = vst [vmem:[#allocation8 + $0xc0] sm:$0xff] %v997
        %1030 = vst [vmem:[#allocation8 + $0xc8] sm:$0xff] %v998
        %1031 = vst [vmem:[#allocation8 + $0xd0] sm:$0xff] %v999
        %1032 = vst [vmem:[#allocation8 + $0xd8] sm:$0xff] %v1000
        %1033 = vst [vmem:[#allocation8 + $0xe0] sm:$0xff] %v1001
        %1034 = vst [vmem:[#allocation8 + $0xe8] sm:$0xff] %v1002
        %1035 = vst [vmem:[#allocation8 + $0xf0] sm:$0xff] %v1003
        %1036 = vst [vmem:[#allocation8 + $0xf8] sm:$0xff] %v1004
        %s1037 = sand.u32 %s85, 1
        %s1038 = scalar_lea.sflag [#allocation4], %s1037
        %s1039 = sand.u32 %s85, 1
        %s1040 = smul.addr %s1039, 256
        %s1041 = scalar_lea.vmem [#allocation7], %s1040
        // Predicated region
        $region41: #{tpu_custom_call.1} parent=27 // pred_check
          %p1042 = pneg %p95
        $region42: #{tpu_custom_call.1} parent=27 // pred_check_branch
          %1044 = sbr.rel (%p1042) target = $region44
        $region43: #{tpu_custom_call.1} parent=27 // pred_region
          %s1045 = smul.u32 32, %s25
          %s1047 = ssub.s32 4096, 4096
          %1048 = vsyncadd %s1038, %s1047
          %s1049 = smul.addr %s1045, 128
          %s1050 = scalar_lea.hbm %s2, %s1049
          %s1051 = sshll.u32 %s1041, 4
          %s1052 = int_to_ptr.vmem [resolvable:$true] %s1051
          %1057 = dma.vmem_to_hbm [thread:$0]  %s1052, 4096, %s1050, %s1038, 128, 128, 8
        $region44: #{tpu_custom_call.1} parent=27 // pred_fallthru
          _
        // Predicated region
        $region45: #{tpu_custom_call.1} parent=27 // pred_check
          %p1058 = pneg %p116
        $region46: #{tpu_custom_call.1} parent=27 // pred_check_branch
          %1060 = sbr.rel (%p1058) target = $region48
        $region47: #{tpu_custom_call.1} parent=27 // pred_region
          %s1062 = ssub.s32 4096, 4096
          %1063 = vsyncadd [#allocation9], %s1062
          %s1064 = sshll.u32 [#allocation8], 4
          %s1065 = int_to_ptr.vmem [resolvable:$true] %s1064
          %1070 = dma.vmem_to_hbm [thread:$0]  %s1065, 4096, %s3, [#allocation9], 256, 256, 16
        $region48: #{tpu_custom_call.1} parent=27 // pred_fallthru
          _
        // Predicated region
        $region49: #{tpu_custom_call.1} parent=27 // pred_check
          %p1071 = pneg %p116
        $region50: #{tpu_custom_call.1} parent=27 // pred_check_branch
          %1073 = sbr.rel (%p1071) target = $region52
        $region51: #{tpu_custom_call.1} parent=27 // pred_region
          %1074 = dma.done [#allocation9], 4096
        $region52: #{tpu_custom_call.1} parent=27 // pred_fallthru
          _
      $region28: #{tpu_custom_call.1} parent=5 // pred_fallthru
        _
      %p1075 = scmp.le.s32.totalorder 2, %s20
      // Predicated region
      $region53: #{tpu_custom_call.1} parent=5 // pred_check
        %p1076 = pneg %p1075
      $region54: #{tpu_custom_call.1} parent=5 // pred_check_branch
        %1078 = sbr.rel (%p1076) target = $region56
      $region55: #{tpu_custom_call.1} parent=5 // pred_region
        %s1079 = ssub.s32 %s20, 2
        // Predicated region
        $region57: #{tpu_custom_call.1} parent=55 // pred_check
          %p1080 = pneg %p101
        $region58: #{tpu_custom_call.1} parent=55 // pred_check_branch
          %1082 = sbr.rel (%p1080) target = $region60
        $region59: #{tpu_custom_call.1} parent=55 // pred_region
          %s1083 = sand.u32 %s86, 1
          %s1084 = scalar_lea.sflag [#allocation4], %s1083
          %s1085 = sand.u32 %s86, 1
          %s1086 = smul.addr %s1085, 256
          %s1087 = scalar_lea.vmem [#allocation7], %s1086
          %1088 = dma.done %s1084, 4096
        $region60: #{tpu_custom_call.1} parent=55 // pred_fallthru
          _
      $region56: #{tpu_custom_call.1} parent=5 // pred_fallthru
        _
    $region6: #{tpu_custom_call.1} parent=1 // loop_footer
      %s24 = sadd.s32 1, %s20
    $region7: #{tpu_custom_call.1} parent=1 // loop_footer_branch
      %19 = sbr.rel target = $region3
    $region8: #{tpu_custom_call.1} parent=1 // loop_exit
      _
    %1089 = vsyncpa [#allocation3], 1
    %s1090 = scalar_lea.sflag [#allocation3], 1
    %1091 = vsyncpa %s1090, 1
    %1092 = vsyncpa [#allocation6], 1
    %s1093 = scalar_lea.sflag [#allocation6], 1
    %1094 = vsyncpa %s1093, 1
    %1095 = vsyncpa [#allocation4], 1
    %s1096 = scalar_lea.sflag [#allocation4], 1
    %1097 = vsyncpa %s1096, 1
    %1098 = vsyncpa [#allocation9], 1

</llo_original>
